<compile_context>
chip_gen: v7x
topology: tpu7x:2x2x1
jax: 0.10.0
libtpu: 0.0.40
codegen_flags: <defaults>
</compile_context>

<pallas_src>
import functools
import math

import jax
import jax.numpy as jnp
from jax import lax
from jax.experimental import pallas as pl
from jax.experimental.pallas import tpu as pltpu


# ---------------------------------------------------------------------------
# VMEM budgeting / tile selection
# ---------------------------------------------------------------------------
def _vmem_limits():
    """Return (vmem_limit_bytes, tile_budget_bytes) gated on physical VMEM."""
    phys = None
    try:
        info = pltpu.get_tpu_info()
        phys = int(getattr(info, "vmem_capacity_bytes", 0)) or None
    except Exception:
        phys = None
    if phys is not None and phys >= 96 * 1024 * 1024:
        limit = 64 * 1024 * 1024      # v5e / v6e: 128 MiB physical VMEM
    else:
        limit = 32 * 1024 * 1024      # v7x (64 MiB physical) or unknown: safe
    budget = (limit * 3) // 4         # headroom for pipeline scratch / spill
    return limit, budget


def _choose_hw_tile(hw, n_batch, per_lane_bytes, budget):
    """Lane (H*W) tile: full extent if it fits, else largest multiple of 128."""
    max_t = max(budget // max(per_lane_bytes, 1), 1)
    if hw <= max_t:
        if n_batch < 2 and hw >= 256:
            # Keep >= 2 parallel grid steps so both v7x TensorCores get work.
            return min(hw, (((hw + 1) // 2 + 127) // 128) * 128)
        return hw                      # full extent: lane-dense, no masked edge
    t = min(max_t, 8192)
    t = (t // 128) * 128
    if t < 128:
        t = min(128, hw)               # theoretical huge-C edge; accept overshoot
    return t


def _choose_row_tile(r, c, itemsize, budget):
    """Row tile for the (unused-by-this-block) channels_last path."""
    if r <= 8:
        return r
    per_row = 4 * c * itemsize + 4 * 3 * c
    max_rows = max(budget // max(per_row, 1), 1)
    tr = min(2048, r, max_rows)
    return max(8, (tr // 8) * 8)


# ---------------------------------------------------------------------------
# Exact-erf GELU built from always-lowering ops (exp / mul / add / where)
# ---------------------------------------------------------------------------
_SQRT_HALF = 0.7071067811865476


def _erf_poly(x):
    """Abramowitz & Stegun 7.1.26 erf approximation, |err| <= 1.5e-7."""
    p = 0.3275911
    a1, a2, a3, a4, a5 = (0.254829592, -0.284496736, 1.421413741,
                          -1.453152027, 1.061405429)
    ax = jnp.abs(x)
    t = 1.0 / (1.0 + p * ax)
    poly = ((((a5 * t + a4) * t + a3) * t + a2) * t + a1) * t
    y = 1.0 - poly * jnp.exp(-ax * ax)
    return jnp.where(x < 0.0, -y, y)


def _gelu_exact(x):
    # nn.GELU() default: 0.5 * x * (1 + erf(x / sqrt(2)))
    return 0.5 * x * (1.0 + _erf_poly(x * _SQRT_HALF))


# ---------------------------------------------------------------------------
# Fused ConvNeXt tail kernel: LN -> pw1 -> GELU -> pw2 -> residual
# ---------------------------------------------------------------------------
def _fused_tail_kernel(y_ref, sc_ref, lnw_ref, lnb_ref, w1_ref, b1_ref,
                       w2_ref, b2_ref, o_ref, *, eps, c_short, c_out):
    x = y_ref[0].astype(jnp.float32)                       # (C_in, T)
    c_in = x.shape[0]

    # One-pass LayerNorm statistics over the channel (sublane) axis.
    inv_c = jnp.float32(1.0 / c_in)
    mean = jnp.sum(x, axis=0, keepdims=True) * inv_c       # (1, T)
    ex2 = jnp.sum(x * x, axis=0, keepdims=True) * inv_c    # (1, T)
    var = jnp.maximum(ex2 - mean * mean, 0.0)
    inv = lax.rsqrt(var + eps)                             # EUP slot
    h = (x - mean) * inv
    h = h * lnw_ref[...].astype(jnp.float32) + lnb_ref[...].astype(jnp.float32)

    # pw1 (1x1 conv) as a channel matmul on the MXU, then exact-erf GELU.
    h1 = jnp.dot(w1_ref[...].astype(jnp.float32), h,
                 preferred_element_type=jnp.float32)       # (C_mid, T)
    h1 = h1 + b1_ref[...].astype(jnp.float32)
    h1 = _gelu_exact(h1)

    # pw2 (1x1 conv).
    h2 = jnp.dot(w2_ref[...].astype(jnp.float32), h1,
                 preferred_element_type=jnp.float32)       # (C_out, T)
    h2 = h2 + b2_ref[...].astype(jnp.float32)

    # Channel-padded residual add in the epilogue (no padded HBM tensor).
    sc = sc_ref[0].astype(jnp.float32)                     # (C_short, T)
    if c_short == c_out:
        h2 = h2 + sc
    else:
        pad = jnp.zeros((c_out - c_short, sc.shape[-1]), jnp.float32)
        h2 = h2 + jnp.concatenate([sc, pad], axis=0)

    o_ref[0] = h2.astype(o_ref.dtype)


def convnext_tail_fused(y_dw, shortcut, ln_w, ln_b, pw1_w, pw1_b, pw2_w, pw2_b,
                        *, eps=1e-6):
    """Fused LN -> pw1 -> GELU -> pw2 -> (+ padded shortcut) on NCHW input."""
    N, C_in, H, W = y_dw.shape
    HW = H * W
    C_sc = shortcut.shape[1]
    C_mid, C_out = pw1_w.shape[0], pw2_w.shape[0]
    out_dtype = y_dw.dtype

    vmem_limit, budget = _vmem_limits()
    in_is = jnp.dtype(y_dw.dtype).itemsize
    out_is = jnp.dtype(out_dtype).itemsize
    # Per-lane bytes: double-buffered DMA tiles + in-kernel f32 working set.
    per_lane = (2 * ((C_in + C_sc) * in_is + C_out * out_is)
                + 4 * (2 * C_in + C_sc + C_mid + 2 * C_out + 8))
    t = _choose_hw_tile(HW, N, per_lane, budget)
    grid = (N, pl.cdiv(HW, t))

    y3 = y_dw.reshape(N, C_in, HW)           # contiguous -> free reshape
    s3 = shortcut.reshape(N, C_sc, HW)

    kernel = functools.partial(_fused_tail_kernel, eps=eps,
                               c_short=C_sc, c_out=C_out)
    out3 = pl.pallas_call(
        kernel,
        out_shape=jax.ShapeDtypeStruct((N, C_out, HW), out_dtype),
        grid_spec=pltpu.PrefetchScalarGridSpec(
            num_scalar_prefetch=0,
            grid=grid,
            in_specs=[
                pl.BlockSpec((1, C_in, t), lambda n, i: (n, 0, i)),
                pl.BlockSpec((1, C_sc, t), lambda n, i: (n, 0, i)),
                # Constant index_maps -> weights stay resident in VMEM.
                pl.BlockSpec((C_in, 1), lambda n, i: (0, 0)),
                pl.BlockSpec((C_in, 1), lambda n, i: (0, 0)),
                pl.BlockSpec((C_mid, C_in), lambda n, i: (0, 0)),
                pl.BlockSpec((C_mid, 1), lambda n, i: (0, 0)),
                pl.BlockSpec((C_out, C_mid), lambda n, i: (0, 0)),
                pl.BlockSpec((C_out, 1), lambda n, i: (0, 0)),
            ],
            out_specs=pl.BlockSpec((1, C_out, t), lambda n, i: (n, 0, i)),
        ),
        compiler_params=pltpu.CompilerParams(
            dimension_semantics=("parallel", "parallel"),
            vmem_limit_bytes=vmem_limit,
        ),
    )(y3, s3,
      ln_w.reshape(C_in, 1), ln_b.reshape(C_in, 1),
      pw1_w.reshape(C_mid, C_in), pw1_b.reshape(C_mid, 1),
      pw2_w.reshape(C_out, C_mid), pw2_b.reshape(C_out, 1))
    return out3.reshape(N, C_out, H, W)


# ---------------------------------------------------------------------------
# Standalone Pallas LayerNorm (the LayerNorm module on its own)
# ---------------------------------------------------------------------------
def _ln_channels_first_kernel(x_ref, w_ref, b_ref, o_ref, *, eps):
    x = x_ref[0].astype(jnp.float32)                       # (C, T)
    c = x.shape[0]
    inv_c = jnp.float32(1.0 / c)
    mean = jnp.sum(x, axis=0, keepdims=True) * inv_c       # one-pass stats
    ex2 = jnp.sum(x * x, axis=0, keepdims=True) * inv_c
    var = jnp.maximum(ex2 - mean * mean, 0.0)
    inv = lax.rsqrt(var + eps)
    w = w_ref[...].astype(jnp.float32)                     # (C, 1)
    b = b_ref[...].astype(jnp.float32)
    o_ref[0] = ((x - mean) * inv * w + b).astype(o_ref.dtype)


def _ln_channels_last_kernel(x_ref, w_ref, b_ref, o_ref, *, eps):
    # TODO(synk): C on lanes is not lane-dense for C<128; unused by this block.
    x = x_ref[...].astype(jnp.float32)                     # (TR, C)
    c = x.shape[-1]
    inv_c = jnp.float32(1.0 / c)
    mean = jnp.sum(x, axis=-1, keepdims=True) * inv_c
    ex2 = jnp.sum(x * x, axis=-1, keepdims=True) * inv_c
    var = jnp.maximum(ex2 - mean * mean, 0.0)
    inv = lax.rsqrt(var + eps)
    w = w_ref[...].astype(jnp.float32)                     # (1, C)
    b = b_ref[...].astype(jnp.float32)
    o_ref[...] = ((x - mean) * inv * w + b).astype(o_ref.dtype)


def _layer_norm_channels_first(x, weight, bias, eps):
    N, C, H, W = x.shape
    HW = H * W
    x3 = x.reshape(N, C, HW)
    vmem_limit, budget = _vmem_limits()
    itemsize = jnp.dtype(x.dtype).itemsize
    per_lane = 4 * C * itemsize + 4 * 3 * C + 16           # DMA bufs + f32 temps
    t = _choose_hw_tile(HW, N, per_lane, budget)
    grid = (N, pl.cdiv(HW, t))

    kernel = functools.partial(_ln_channels_first_kernel, eps=eps)
    y3 = pl.pallas_call(
        kernel,
        out_shape=jax.ShapeDtypeStruct((N, C, HW), x.dtype),
        grid_spec=pltpu.PrefetchScalarGridSpec(
            num_scalar_prefetch=0,
            grid=grid,
            in_specs=[
                pl.BlockSpec((1, C, t), lambda n, i: (n, 0, i)),
                pl.BlockSpec((C, 1), lambda n, i: (0, 0)),
                pl.BlockSpec((C, 1), lambda n, i: (0, 0)),
            ],
            out_specs=pl.BlockSpec((1, C, t), lambda n, i: (n, 0, i)),
        ),
        compiler_params=pltpu.CompilerParams(
            dimension_semantics=("parallel", "parallel"),
            vmem_limit_bytes=vmem_limit,
        ),
    )(x3, weight.reshape(C, 1), bias.reshape(C, 1))
    return y3.reshape(N, C, H, W)


def _layer_norm_channels_last(x, weight, bias, eps):
    C = x.shape[-1]
    lead = x.shape[:-1]
    R = math.prod(lead) if lead else 1
    x2 = x.reshape(R, C)
    vmem_limit, budget = _vmem_limits()
    tr = _choose_row_tile(R, C, jnp.dtype(x.dtype).itemsize, budget)
    grid = (pl.cdiv(R, tr),)

    kernel = functools.partial(_ln_channels_last_kernel, eps=eps)
    y2 = pl.pallas_call(
        kernel,
        out_shape=jax.ShapeDtypeStruct((R, C), x.dtype),
        grid_spec=pltpu.PrefetchScalarGridSpec(
            num_scalar_prefetch=0,
            grid=grid,
            in_specs=[
                pl.BlockSpec((tr, C), lambda i: (i, 0)),
                pl.BlockSpec((1, C), lambda i: (0, 0)),
                pl.BlockSpec((1, C), lambda i: (0, 0)),
            ],
            out_specs=pl.BlockSpec((tr, C), lambda i: (i, 0)),
        ),
        compiler_params=pltpu.CompilerParams(
            dimension_semantics=("parallel",),
            vmem_limit_bytes=vmem_limit,
        ),
    )(x2, weight.reshape(1, C), bias.reshape(1, C))
    return y2.reshape(*lead, C)


def layer_norm(x, weight, bias, eps=1e-6, data_format="channels_first"):
    if data_format == "channels_first":
        return _layer_norm_channels_first(x, weight, bias, eps)
    elif data_format == "channels_last":
        return _layer_norm_channels_last(x, weight, bias, eps)
    raise NotImplementedError(data_format)


# ---------------------------------------------------------------------------
# ConvNeXt block forward (matches the PyTorch module)
# ---------------------------------------------------------------------------
def _conv2d_nchw(x, w, b, *, padding=0, groups=1):
    dn = lax.conv_dimension_numbers(x.shape, w.shape, ("NCHW", "OIHW", "NCHW"))
    y = lax.conv_general_dilated(
        x, w, window_strides=(1, 1),
        padding=[(padding, padding), (padding, padding)],
        dimension_numbers=dn, feature_group_count=groups)
    return y + b[None, :, None, None]


def _ln_channels_first_reference(x, weight, bias, eps=1e-6):
    u = jnp.mean(x, axis=1, keepdims=True)
    s = jnp.mean((x - u) ** 2, axis=1, keepdims=True)
    xn = (x - u) / jnp.sqrt(s + eps)
    return weight[None, :, None, None] * xn + bias[None, :, None, None]


def convnext_forward(params, x, *, kernel=3, impl="pallas"):
    c_in = x.shape[1]
    pad = (kernel - 1) // 2
    # TODO(synk): depthwise 3x3 grouped conv kept in XLA (not a Pallas kernel).
    y = _conv2d_nchw(x, params["dw_w"], params["dw_b"], padding=pad, groups=c_in)

    if impl == "pallas":
        # Fused LN -> pw1 -> GELU -> pw2 -> channel-padded residual.
        return convnext_tail_fused(
            y, x, params["ln_w"], params["ln_b"],
            params["pw1_w"], params["pw1_b"],
            params["pw2_w"], params["pw2_b"], eps=1e-6)

    # Unfused pure-XLA reference path.
    y = _ln_channels_first_reference(y, params["ln_w"], params["ln_b"], 1e-6)
    y = _conv2d_nchw(y, params["pw1_w"], params["pw1_b"])
    y = jax.nn.gelu(y, approximate=False)                  # nn.GELU() (erf)
    y = _conv2d_nchw(y, params["pw2_w"], params["pw2_b"])
    shortcut = x
    c_res, c_sc = y.shape[1], shortcut.shape[1]
    if c_res != c_sc:
        shortcut = jnp.pad(shortcut, ((0, 0), (0, c_res - c_sc), (0, 0), (0, 0)))
    return y + shortcut


# ---------------------------------------------------------------------------
if __name__ == "__main__":
    key = jax.random.PRNGKey(0)
    N, C_in, H, W = 2, 4, 16, 16
    C_out, channel_factor, k = 4, 2, 3
    C_mid = C_out * channel_factor

    keys = jax.random.split(key, 8)
    x = jax.random.normal(keys[0], (N, C_in, H, W), dtype=jnp.float32)
    params = dict(
        dw_w=0.1 * jax.random.normal(keys[1], (C_in, 1, k, k), jnp.float32),
        dw_b=0.1 * jax.random.normal(keys[2], (C_in,), jnp.float32),
        ln_w=jnp.ones((C_in,), jnp.float32),               # torch.ones init
        ln_b=jnp.zeros((C_in,), jnp.float32),              # torch.zeros init
        pw1_w=0.1 * jax.random.normal(keys[3], (C_mid, C_in, 1, 1), jnp.float32),
        pw1_b=0.1 * jax.random.normal(keys[4], (C_mid,), jnp.float32),
        pw2_w=0.1 * jax.random.normal(keys[5], (C_out, C_mid, 1, 1), jnp.float32),
        pw2_b=0.1 * jax.random.normal(keys[6], (C_out,), jnp.float32),
    )

    fwd_pallas = jax.jit(functools.partial(convnext_forward, kernel=k,
                                           impl="pallas"))
    fwd_ref = jax.jit(functools.partial(convnext_forward, kernel=k,
                                        impl="reference"))

    y = jax.block_until_ready(fwd_pallas(params, x))
    y_ref = jax.block_until_ready(fwd_ref(params, x))
    assert y.shape == (N, C_out, H, W)
    assert jnp.allclose(y, y_ref, atol=1e-4, rtol=1e-4)

    # Standalone Pallas LayerNorm check (channels_first).
    ln_in = jax.random.normal(keys[7], (N, C_in, H, W), dtype=jnp.float32)
    ln_out = jax.block_until_ready(
        layer_norm(ln_in, params["ln_w"], params["ln_b"], 1e-6, "channels_first"))
    ln_ref = _ln_channels_first_reference(ln_in, params["ln_w"], params["ln_b"])
    assert jnp.allclose(ln_out, ln_ref, atol=1e-5, rtol=1e-5)

    print("KERNEL_OK")
</pallas_src>

<mosaic_0001>
module attributes {stable_mosaic.version = 11 : i64} {
  func.func @_fused_tail_kernel(%arg0: i32, %arg1: i32, %arg2: memref<1x4x256xf32, #tpu.memory_space<vmem>>, %arg3: memref<1x4x256xf32, #tpu.memory_space<vmem>>, %arg4: memref<4x1xf32, #tpu.memory_space<vmem>>, %arg5: memref<4x1xf32, #tpu.memory_space<vmem>>, %arg6: memref<8x4xf32, #tpu.memory_space<vmem>>, %arg7: memref<8x1xf32, #tpu.memory_space<vmem>>, %arg8: memref<4x8xf32, #tpu.memory_space<vmem>>, %arg9: memref<4x1xf32, #tpu.memory_space<vmem>>, %arg10: memref<1x4x256xf32, #tpu.memory_space<vmem>>) attributes {dimension_semantics = [#tpu.dimension_semantics<parallel>, #tpu.dimension_semantics<parallel>], iteration_bounds = array<i64: 2, 1>, scalar_prefetch = 0 : i64, scratch_operands = 0 : i64, tpu.core_type = #tpu.core_type<tc>, window_params = [{transform_indices = @transform_0, window_bounds = array<i64: 1, 4, 256>}, {transform_indices = @transform_1, window_bounds = array<i64: 1, 4, 256>}, {pipeline_mode = #tpu.pipeline_mode<synchronous>, transform_indices = @transform_2, window_bounds = array<i64: 4, 1>}, {pipeline_mode = #tpu.pipeline_mode<synchronous>, transform_indices = @transform_3, window_bounds = array<i64: 4, 1>}, {pipeline_mode = #tpu.pipeline_mode<synchronous>, transform_indices = @transform_4, window_bounds = array<i64: 8, 4>}, {pipeline_mode = #tpu.pipeline_mode<synchronous>, transform_indices = @transform_5, window_bounds = array<i64: 8, 1>}, {pipeline_mode = #tpu.pipeline_mode<synchronous>, transform_indices = @transform_6, window_bounds = array<i64: 4, 8>}, {pipeline_mode = #tpu.pipeline_mode<synchronous>, transform_indices = @transform_7, window_bounds = array<i64: 4, 1>}, {transform_indices = @transform_8, window_bounds = array<i64: 1, 4, 256>}]} {
    %c0 = arith.constant 0 : index
    %c0_0 = arith.constant 0 : index
    %c0_1 = arith.constant 0 : index
    %0 = vector.load %arg2[%c0, %c0_0, %c0_1] : memref<1x4x256xf32, #tpu.memory_space<vmem>>, vector<1x4x256xf32>
    %1 = vector.shape_cast %0 : vector<1x4x256xf32> to vector<4x256xf32>
    %cst = arith.constant dense<0.000000e+00> : vector<256xf32>
    %2 = vector.multi_reduction <add>, %1, %cst [0] : vector<4x256xf32> to vector<256xf32>
    %3 = vector.shape_cast %2 : vector<256xf32> to vector<1x256xf32>
    %cst_2 = arith.constant 2.500000e-01 : f32
    %4 = vector.broadcast %cst_2 : f32 to vector<1x256xf32>
    %5 = arith.mulf %3, %4 : vector<1x256xf32>
    %6 = arith.mulf %1, %1 : vector<4x256xf32>
    %cst_3 = arith.constant dense<0.000000e+00> : vector<256xf32>
    %7 = vector.multi_reduction <add>, %6, %cst_3 [0] : vector<4x256xf32> to vector<256xf32>
    %8 = vector.shape_cast %7 : vector<256xf32> to vector<1x256xf32>
    %cst_4 = arith.constant 2.500000e-01 : f32
    %9 = vector.broadcast %cst_4 : f32 to vector<1x256xf32>
    %10 = arith.mulf %8, %9 : vector<1x256xf32>
    %11 = arith.mulf %5, %5 : vector<1x256xf32>
    %12 = arith.subf %10, %11 : vector<1x256xf32>
    %cst_5 = arith.constant 0.000000e+00 : f32
    %13 = vector.broadcast %cst_5 : f32 to vector<1x256xf32>
    %14 = arith.maximumf %12, %13 : vector<1x256xf32>
    %cst_6 = arith.constant 9.99999997E-7 : f32
    %15 = vector.broadcast %cst_6 : f32 to vector<1x256xf32>
    %16 = arith.addf %14, %15 : vector<1x256xf32>
    %17 = math.rsqrt %16 : vector<1x256xf32>
    %18 = vector.broadcast %5 : vector<1x256xf32> to vector<4x256xf32>
    %19 = arith.subf %1, %18 : vector<4x256xf32>
    %20 = vector.broadcast %17 : vector<1x256xf32> to vector<4x256xf32>
    %21 = arith.mulf %19, %20 : vector<4x256xf32>
    %c0_7 = arith.constant 0 : index
    %c0_8 = arith.constant 0 : index
    %22 = vector.load %arg4[%c0_7, %c0_8] : memref<4x1xf32, #tpu.memory_space<vmem>>, vector<4x1xf32>
    %23 = vector.broadcast %22 : vector<4x1xf32> to vector<4x256xf32>
    %24 = arith.mulf %21, %23 : vector<4x256xf32>
    %c0_9 = arith.constant 0 : index
    %c0_10 = arith.constant 0 : index
    %25 = vector.load %arg5[%c0_9, %c0_10] : memref<4x1xf32, #tpu.memory_space<vmem>>, vector<4x1xf32>
    %26 = vector.broadcast %25 : vector<4x1xf32> to vector<4x256xf32>
    %27 = arith.addf %24, %26 : vector<4x256xf32>
    %c0_11 = arith.constant 0 : index
    %c0_12 = arith.constant 0 : index
    %28 = vector.load %arg6[%c0_11, %c0_12] : memref<8x4xf32, #tpu.memory_space<vmem>>, vector<8x4xf32>
    %cst_13 = arith.constant dense<0.000000e+00> : vector<8x256xf32>
    %29 = tpu.matmul %28, %27, %cst_13 {dimension_numbers = #tpu.dot_dimension_numbers<[1], [0], [0], [1], [0, 0, 1, 1], [], []>} : vector<8x4xf32>, vector<4x256xf32>, vector<8x256xf32> -> vector<8x256xf32>
    %c0_14 = arith.constant 0 : index
    %c0_15 = arith.constant 0 : index
    %30 = vector.load %arg7[%c0_14, %c0_15] : memref<8x1xf32, #tpu.memory_space<vmem>>, vector<8x1xf32>
    %31 = vector.broadcast %30 : vector<8x1xf32> to vector<8x256xf32>
    %32 = arith.addf %29, %31 : vector<8x256xf32>
    %cst_16 = arith.constant 5.000000e-01 : f32
    %33 = vector.broadcast %cst_16 : f32 to vector<8x256xf32>
    %34 = arith.mulf %33, %32 : vector<8x256xf32>
    %cst_17 = arith.constant 0.707106769 : f32
    %35 = vector.broadcast %cst_17 : f32 to vector<8x256xf32>
    %36 = arith.mulf %32, %35 : vector<8x256xf32>
    %37 = math.absf %36 : vector<8x256xf32>
    %cst_18 = arith.constant 0.327591091 : f32
    %38 = vector.broadcast %cst_18 : f32 to vector<8x256xf32>
    %39 = arith.mulf %38, %37 : vector<8x256xf32>
    %cst_19 = arith.constant 1.000000e+00 : f32
    %40 = vector.broadcast %cst_19 : f32 to vector<8x256xf32>
    %41 = arith.addf %40, %39 : vector<8x256xf32>
    %cst_20 = arith.constant 1.000000e+00 : f32
    %42 = vector.broadcast %cst_20 : f32 to vector<8x256xf32>
    %43 = arith.divf %42, %41 : vector<8x256xf32>
    %cst_21 = arith.constant 1.06140542 : f32
    %44 = vector.broadcast %cst_21 : f32 to vector<8x256xf32>
    %45 = arith.mulf %44, %43 : vector<8x256xf32>
    %cst_22 = arith.constant -1.45315206 : f32
    %46 = vector.broadcast %cst_22 : f32 to vector<8x256xf32>
    %47 = arith.addf %45, %46 : vector<8x256xf32>
    %48 = arith.mulf %47, %43 : vector<8x256xf32>
    %cst_23 = arith.constant 1.42141378 : f32
    %49 = vector.broadcast %cst_23 : f32 to vector<8x256xf32>
    %50 = arith.addf %48, %49 : vector<8x256xf32>
    %51 = arith.mulf %50, %43 : vector<8x256xf32>
    %cst_24 = arith.constant -0.284496725 : f32
    %52 = vector.broadcast %cst_24 : f32 to vector<8x256xf32>
    %53 = arith.addf %51, %52 : vector<8x256xf32>
    %54 = arith.mulf %53, %43 : vector<8x256xf32>
    %cst_25 = arith.constant 0.254829586 : f32
    %55 = vector.broadcast %cst_25 : f32 to vector<8x256xf32>
    %56 = arith.addf %54, %55 : vector<8x256xf32>
    %57 = arith.mulf %56, %43 : vector<8x256xf32>
    %cst_26 = arith.constant 0.000000e+00 : f32
    %58 = vector.broadcast %cst_26 : f32 to vector<8x256xf32>
    %59 = arith.subf %58, %37 : vector<8x256xf32>
    %60 = arith.mulf %59, %37 : vector<8x256xf32>
    %61 = math.exp %60 : vector<8x256xf32>
    %62 = arith.mulf %57, %61 : vector<8x256xf32>
    %cst_27 = arith.constant 1.000000e+00 : f32
    %63 = vector.broadcast %cst_27 : f32 to vector<8x256xf32>
    %64 = arith.subf %63, %62 : vector<8x256xf32>
    %cst_28 = arith.constant 0.000000e+00 : f32
    %65 = vector.broadcast %cst_28 : f32 to vector<8x256xf32>
    %66 = arith.cmpf olt, %36, %65 : vector<8x256xf32>
    %cst_29 = arith.constant 0.000000e+00 : f32
    %67 = vector.broadcast %cst_29 : f32 to vector<8x256xf32>
    %68 = arith.subf %67, %64 : vector<8x256xf32>
    %69 = arith.select %66, %68, %64 : vector<8x256xi1>, vector<8x256xf32>
    %cst_30 = arith.constant 1.000000e+00 : f32
    %70 = vector.broadcast %cst_30 : f32 to vector<8x256xf32>
    %71 = arith.addf %70, %69 : vector<8x256xf32>
    %72 = arith.mulf %34, %71 : vector<8x256xf32>
    %c0_31 = arith.constant 0 : index
    %c0_32 = arith.constant 0 : index
    %73 = vector.load %arg8[%c0_31, %c0_32] : memref<4x8xf32, #tpu.memory_space<vmem>>, vector<4x8xf32>
    %cst_33 = arith.constant dense<0.000000e+00> : vector<4x256xf32>
    %74 = tpu.matmul %73, %72, %cst_33 {dimension_numbers = #tpu.dot_dimension_numbers<[1], [0], [0], [1], [0, 0, 1, 1], [], []>} : vector<4x8xf32>, vector<8x256xf32>, vector<4x256xf32> -> vector<4x256xf32>
    %c0_34 = arith.constant 0 : index
    %c0_35 = arith.constant 0 : index
    %75 = vector.load %arg9[%c0_34, %c0_35] : memref<4x1xf32, #tpu.memory_space<vmem>>, vector<4x1xf32>
    %76 = vector.broadcast %75 : vector<4x1xf32> to vector<4x256xf32>
    %77 = arith.addf %74, %76 : vector<4x256xf32>
    %c0_36 = arith.constant 0 : index
    %c0_37 = arith.constant 0 : index
    %c0_38 = arith.constant 0 : index
    %78 = vector.load %arg3[%c0_36, %c0_37, %c0_38] : memref<1x4x256xf32, #tpu.memory_space<vmem>>, vector<1x4x256xf32>
    %79 = vector.shape_cast %78 : vector<1x4x256xf32> to vector<4x256xf32>
    %80 = arith.addf %77, %79 : vector<4x256xf32>
    %c0_39 = arith.constant 0 : index
    %c0_40 = arith.constant 0 : index
    %c0_41 = arith.constant 0 : index
    %81 = vector.load %arg10[%c0_39, %c0_40, %c0_41] : memref<1x4x256xf32, #tpu.memory_space<vmem>>, vector<1x4x256xf32>
    %82 = vector.shape_cast %81 : vector<1x4x256xf32> to vector<4x256xf32>
    %83 = vector.shape_cast %80 : vector<4x256xf32> to vector<1x4x256xf32>
    tpu.vector_store %arg10[%c0_39, %c0_40, %c0_41], %83 {strides = array<i32>} : memref<1x4x256xf32, #tpu.memory_space<vmem>>, vector<1x4x256xf32>,
    return
  }
  func.func @transform_0(%arg0: i32, %arg1: i32) -> (i32, i32, i32) {
    %c0_i32 = arith.constant 0 : i32
    %c0_i32_0 = arith.constant 0 : i32
    return %arg0, %c0_i32, %arg1 : i32, i32, i32
  }
  func.func @transform_1(%arg0: i32, %arg1: i32) -> (i32, i32, i32) {
    %c0_i32 = arith.constant 0 : i32
    %c0_i32_0 = arith.constant 0 : i32
    return %arg0, %c0_i32, %arg1 : i32, i32, i32
  }
  func.func @transform_2(%arg0: i32, %arg1: i32) -> (i32, i32) {
    %c0_i32 = arith.constant 0 : i32
    %c0_i32_0 = arith.constant 0 : i32
    %c0_i32_1 = arith.constant 0 : i32
    return %c0_i32, %c0_i32_0 : i32, i32
  }
  func.func @transform_3(%arg0: i32, %arg1: i32) -> (i32, i32) {
    %c0_i32 = arith.constant 0 : i32
    %c0_i32_0 = arith.constant 0 : i32
    %c0_i32_1 = arith.constant 0 : i32
    return %c0_i32, %c0_i32_0 : i32, i32
  }
  func.func @transform_4(%arg0: i32, %arg1: i32) -> (i32, i32) {
    %c0_i32 = arith.constant 0 : i32
    %c0_i32_0 = arith.constant 0 : i32
    %c0_i32_1 = arith.constant 0 : i32
    return %c0_i32, %c0_i32_0 : i32, i32
  }
  func.func @transform_5(%arg0: i32, %arg1: i32) -> (i32, i32) {
    %c0_i32 = arith.constant 0 : i32
    %c0_i32_0 = arith.constant 0 : i32
    %c0_i32_1 = arith.constant 0 : i32
    return %c0_i32, %c0_i32_0 : i32, i32
  }
  func.func @transform_6(%arg0: i32, %arg1: i32) -> (i32, i32) {
    %c0_i32 = arith.constant 0 : i32
    %c0_i32_0 = arith.constant 0 : i32
    %c0_i32_1 = arith.constant 0 : i32
    return %c0_i32, %c0_i32_0 : i32, i32
  }
  func.func @transform_7(%arg0: i32, %arg1: i32) -> (i32, i32) {
    %c0_i32 = arith.constant 0 : i32
    %c0_i32_0 = arith.constant 0 : i32
    %c0_i32_1 = arith.constant 0 : i32
    return %c0_i32, %c0_i32_0 : i32, i32
  }
  func.func @transform_8(%arg0: i32, %arg1: i32) -> (i32, i32, i32) {
    %c0_i32 = arith.constant 0 : i32
    %c0_i32_0 = arith.constant 0 : i32
    return %arg0, %c0_i32, %arg1 : i32, i32, i32
  }
}

</mosaic_0001>

<llo_original>
// kernel: convnext_forward.1
$region0: #{convnext_forward.1}
  #allocation0 [shape = 'u32[]', space=smem, size = 0x4, offset = 0x4, fixed_abs, tag = 'smem constant byte address 0x4 - core index']
  #allocation1 [shape = 'u32[144,128]{1,0:T(1,128)}', space=vmem, size = 0x12000, scoped, tag = 'internal scratch']
  %s0 = inlined_call_operand.vmem [shape: f32[2,4,256], index: 0, kind: input, shape index: {}]
  %s1 = inlined_call_operand.vmem [shape: f32[2,4,256], index: 1, kind: input, shape index: {}]
  %s2 = inlined_call_operand.vmem [shape: f32[4,1], index: 2, kind: input, shape index: {}]
  %s3 = inlined_call_operand.vmem [shape: f32[4,1], index: 3, kind: input, shape index: {}]
  %s4 = inlined_call_operand.vmem [shape: f32[8,4], index: 4, kind: input, shape index: {}]
  %s5 = inlined_call_operand.vmem [shape: f32[8,1], index: 5, kind: input, shape index: {}]
  %s6 = inlined_call_operand.vmem [shape: f32[4,8], index: 6, kind: input, shape index: {}]
  %s7 = inlined_call_operand.vmem [shape: f32[4,1], index: 7, kind: input, shape index: {}]
  %s8 = inlined_call_operand.vmem [shape: f32[2,4,256], index: 8, kind: output, shape index: {}]
  %s9 = sld [smem:[#allocation0]]
  $region65: #{convnext_forward.1} parent=0
    _
  %s11 = ssub.s32 1, %s9
  %s12 = scalar_select 0, %s11, %s9
  loop: start=0, step=1, limit=4
  $region2: #{convnext_forward.1} parent=0 // loop_pre_header
    _
  $region3: #{convnext_forward.1} parent=0 // loop_header
    %s14 = sphi 0, %s18
    %p15 = scmp.ge.s32.totalorder %s14, 4
    %s21 = sphi 0, %s33
    %s22 = sphi 0, %s29
    %s23 = sphi 0, %s21
    %s24 = sphi 0, %s22
    %s25 = sphi 0, %s23
    %s26 = sphi 0, %s24
    %s38 = sphi 0, %s40
    %s41 = sphi 0, %s38
    %s42 = sphi 0, %s41
    %s58 = sphi 0, %s42
    %s66 = sphi 0, %s68
    %s69 = sphi 0, %s66
    %s70 = sphi 0, %s69
    %s86 = sphi 0, %s70
    %s90 = sphi 0, %s90
    %s92 = sphi 0, %s90
    %s93 = sphi 0, %s92
    %s107 = sphi 0, %s93
    %s111 = sphi 0, %s111
    %s113 = sphi 0, %s111
    %s114 = sphi 0, %s113
    %s128 = sphi 0, %s114
    %s132 = sphi 0, %s132
    %s134 = sphi 0, %s132
    %s135 = sphi 0, %s134
    %s149 = sphi 0, %s135
    %s153 = sphi 0, %s153
    %s155 = sphi 0, %s153
    %s156 = sphi 0, %s155
    %s170 = sphi 0, %s156
    %s174 = sphi 0, %s174
    %s176 = sphi 0, %s174
    %s177 = sphi 0, %s176
    %s191 = sphi 0, %s177
    %s195 = sphi 0, %s195
    %s197 = sphi 0, %s195
    %s198 = sphi 0, %s197
    %s212 = sphi 0, %s198
    %s220 = sphi 0, %s222
    %s223 = sphi 0, %s220
    %s224 = sphi 0, %s223
    %s240 = sphi 0, %s224
  $region4: #{convnext_forward.1} parent=0 // loop_header_branch
    %17 = sbr.rel (%p15) target = $region8
  $region5: #{convnext_forward.1} parent=0 // loop_body
    %s19 = ssub.s32 %s14, 1
    %s20 = ssub.s32 %s14, 2
    %s27 = sadd.s32 1, %s22
    %p28 = scmp.ge.s32.totalorder %s27, 1
    %s29 = scalar_select %p28, 0, %s27
    %s30 = sadd.s32 1, %s21
    %s31 = scalar_select %p28, %s30, %s21
    %p32 = scmp.ge.s32.totalorder %s31, 2
    %s33 = scalar_select %p32, 0, %s31
    %s34 = ssub.s32 %s21, %s33
    %s35 = ssub.s32 %s22, %s29
    %s36 = sor.u32 %s34, %s35
    %p37 = scmp.eq.s32.totalorder %s36, 0
    %s39 = sadd.s32 %s38, 1
    %s40 = scalar_select %p37, %s38, %s39
    %p43 = pneg %p37
    %p44 = scmp.eq.s32.totalorder %s14, 1
    %p45 = por %p43, %p44
    %p46 = scmp.ne.s32.totalorder %s38, %s41
    %p47 = scmp.eq.s32.totalorder %s14, 0
    %p48 = por %p46, %p47
    %p49 = scmp.ne.s32.totalorder %s38, %s41
    %p50 = scmp.eq.s32.totalorder %s19, 1
    %p51 = por %p49, %p50
    %p52 = scmp.ne.s32.totalorder %s41, %s42
    %p53 = scmp.eq.s32.totalorder %s19, 0
    %p54 = por %p52, %p53
    %p55 = scmp.ne.s32.totalorder %s41, %s42
    %p56 = scmp.eq.s32.totalorder %s20, 1
    %p57 = por %p55, %p56
    %p59 = scmp.ne.s32.totalorder %s42, %s58
    %p60 = scmp.eq.s32.totalorder %s20, 0
    %p61 = por %p59, %p60
    %s62 = ssub.s32 %s21, %s33
    %s63 = ssub.s32 %s22, %s29
    %s64 = sor.u32 %s62, %s63
    %p65 = scmp.eq.s32.totalorder %s64, 0
    %s67 = sadd.s32 %s66, 1
    %s68 = scalar_select %p65, %s66, %s67
    %p71 = pneg %p65
    %p72 = scmp.eq.s32.totalorder %s14, 1
    %p73 = por %p71, %p72
    %p74 = scmp.ne.s32.totalorder %s66, %s69
    %p75 = scmp.eq.s32.totalorder %s14, 0
    %p76 = por %p74, %p75
    %p77 = scmp.ne.s32.totalorder %s66, %s69
    %p78 = scmp.eq.s32.totalorder %s19, 1
    %p79 = por %p77, %p78
    %p80 = scmp.ne.s32.totalorder %s69, %s70
    %p81 = scmp.eq.s32.totalorder %s19, 0
    %p82 = por %p80, %p81
    %p83 = scmp.ne.s32.totalorder %s69, %s70
    %p84 = scmp.eq.s32.totalorder %s20, 1
    %p85 = por %p83, %p84
    %p87 = scmp.ne.s32.totalorder %s70, %s86
    %p88 = scmp.eq.s32.totalorder %s20, 0
    %p89 = por %p87, %p88
    %s91 = sadd.s32 %s90, 1
    %p94 = scmp.eq.s32.totalorder %s14, 1
    %p95 = scmp.ne.s32.totalorder %s90, %s92
    %p96 = scmp.eq.s32.totalorder %s14, 0
    %p97 = por %p95, %p96
    %p98 = scmp.ne.s32.totalorder %s90, %s92
    %p99 = scmp.eq.s32.totalorder %s19, 1
    %p100 = por %p98, %p99
    %p101 = scmp.ne.s32.totalorder %s92, %s93
    %p102 = scmp.eq.s32.totalorder %s19, 0
    %p103 = por %p101, %p102
    %p104 = scmp.ne.s32.totalorder %s92, %s93
    %p105 = scmp.eq.s32.totalorder %s20, 1
    %p106 = por %p104, %p105
    %p108 = scmp.ne.s32.totalorder %s93, %s107
    %p109 = scmp.eq.s32.totalorder %s20, 0
    %p110 = por %p108, %p109
    %s112 = sadd.s32 %s111, 1
    %p115 = scmp.eq.s32.totalorder %s14, 1
    %p116 = scmp.ne.s32.totalorder %s111, %s113
    %p117 = scmp.eq.s32.totalorder %s14, 0
    %p118 = por %p116, %p117
    %p119 = scmp.ne.s32.totalorder %s111, %s113
    %p120 = scmp.eq.s32.totalorder %s19, 1
    %p121 = por %p119, %p120
    %p122 = scmp.ne.s32.totalorder %s113, %s114
    %p123 = scmp.eq.s32.totalorder %s19, 0
    %p124 = por %p122, %p123
    %p125 = scmp.ne.s32.totalorder %s113, %s114
    %p126 = scmp.eq.s32.totalorder %s20, 1
    %p127 = por %p125, %p126
    %p129 = scmp.ne.s32.totalorder %s114, %s128
    %p130 = scmp.eq.s32.totalorder %s20, 0
    %p131 = por %p129, %p130
    %s133 = sadd.s32 %s132, 1
    %p136 = scmp.eq.s32.totalorder %s14, 1
    %p137 = scmp.ne.s32.totalorder %s132, %s134
    %p138 = scmp.eq.s32.totalorder %s14, 0
    %p139 = por %p137, %p138
    %p140 = scmp.ne.s32.totalorder %s132, %s134
    %p141 = scmp.eq.s32.totalorder %s19, 1
    %p142 = por %p140, %p141
    %p143 = scmp.ne.s32.totalorder %s134, %s135
    %p144 = scmp.eq.s32.totalorder %s19, 0
    %p145 = por %p143, %p144
    %p146 = scmp.ne.s32.totalorder %s134, %s135
    %p147 = scmp.eq.s32.totalorder %s20, 1
    %p148 = por %p146, %p147
    %p150 = scmp.ne.s32.totalorder %s135, %s149
    %p151 = scmp.eq.s32.totalorder %s20, 0
    %p152 = por %p150, %p151
    %s154 = sadd.s32 %s153, 1
    %p157 = scmp.eq.s32.totalorder %s14, 1
    %p158 = scmp.ne.s32.totalorder %s153, %s155
    %p159 = scmp.eq.s32.totalorder %s14, 0
    %p160 = por %p158, %p159
    %p161 = scmp.ne.s32.totalorder %s153, %s155
    %p162 = scmp.eq.s32.totalorder %s19, 1
    %p163 = por %p161, %p162
    %p164 = scmp.ne.s32.totalorder %s155, %s156
    %p165 = scmp.eq.s32.totalorder %s19, 0
    %p166 = por %p164, %p165
    %p167 = scmp.ne.s32.totalorder %s155, %s156
    %p168 = scmp.eq.s32.totalorder %s20, 1
    %p169 = por %p167, %p168
    %p171 = scmp.ne.s32.totalorder %s156, %s170
    %p172 = scmp.eq.s32.totalorder %s20, 0
    %p173 = por %p171, %p172
    %s175 = sadd.s32 %s174, 1
    %p178 = scmp.eq.s32.totalorder %s14, 1
    %p179 = scmp.ne.s32.totalorder %s174, %s176
    %p180 = scmp.eq.s32.totalorder %s14, 0
    %p181 = por %p179, %p180
    %p182 = scmp.ne.s32.totalorder %s174, %s176
    %p183 = scmp.eq.s32.totalorder %s19, 1
    %p184 = por %p182, %p183
    %p185 = scmp.ne.s32.totalorder %s176, %s177
    %p186 = scmp.eq.s32.totalorder %s19, 0
    %p187 = por %p185, %p186
    %p188 = scmp.ne.s32.totalorder %s176, %s177
    %p189 = scmp.eq.s32.totalorder %s20, 1
    %p190 = por %p188, %p189
    %p192 = scmp.ne.s32.totalorder %s177, %s191
    %p193 = scmp.eq.s32.totalorder %s20, 0
    %p194 = por %p192, %p193
    %s196 = sadd.s32 %s195, 1
    %p199 = scmp.eq.s32.totalorder %s14, 1
    %p200 = scmp.ne.s32.totalorder %s195, %s197
    %p201 = scmp.eq.s32.totalorder %s14, 0
    %p202 = por %p200, %p201
    %p203 = scmp.ne.s32.totalorder %s195, %s197
    %p204 = scmp.eq.s32.totalorder %s19, 1
    %p205 = por %p203, %p204
    %p206 = scmp.ne.s32.totalorder %s197, %s198
    %p207 = scmp.eq.s32.totalorder %s19, 0
    %p208 = por %p206, %p207
    %p209 = scmp.ne.s32.totalorder %s197, %s198
    %p210 = scmp.eq.s32.totalorder %s20, 1
    %p211 = por %p209, %p210
    %p213 = scmp.ne.s32.totalorder %s198, %s212
    %p214 = scmp.eq.s32.totalorder %s20, 0
    %p215 = por %p213, %p214
    %s216 = ssub.s32 %s21, %s33
    %s217 = ssub.s32 %s22, %s29
    %s218 = sor.u32 %s216, %s217
    %p219 = scmp.eq.s32.totalorder %s218, 0
    %s221 = sadd.s32 %s220, 1
    %s222 = scalar_select %p219, %s220, %s221
    %p225 = pneg %p219
    %p226 = scmp.eq.s32.totalorder %s14, 1
    %p227 = por %p225, %p226
    %p228 = scmp.ne.s32.totalorder %s220, %s223
    %p229 = scmp.eq.s32.totalorder %s14, 0
    %p230 = por %p228, %p229
    %p231 = scmp.ne.s32.totalorder %s220, %s223
    %p232 = scmp.eq.s32.totalorder %s19, 1
    %p233 = por %p231, %p232
    %p234 = scmp.ne.s32.totalorder %s223, %s224
    %p235 = scmp.eq.s32.totalorder %s19, 0
    %p236 = por %p234, %p235
    %p237 = scmp.ne.s32.totalorder %s223, %s224
    %p238 = scmp.eq.s32.totalorder %s20, 1
    %p239 = por %p237, %p238
    %p241 = scmp.ne.s32.totalorder %s224, %s240
    %p242 = scmp.eq.s32.totalorder %s20, 0
    %p243 = por %p241, %p242
    %p244 = scmp.le.s32.totalorder 1, %s14
    %p245 = scmp.lt.s32.totalorder %s14, 3
    %p246 = pnand %p244, %p245
    %p247 = pneg %p246
    // Predicated region
    $region9: #{convnext_forward.1} parent=5 // pred_check
      _
    $region10: #{convnext_forward.1} parent=5 // pred_check_branch
      %249 = sbr.rel (%p246) target = $region12
    $region11: #{convnext_forward.1} parent=5 // pred_region
      %s250 = ssub.s32 %s14, 1
      // Predicated region
      $region13: #{convnext_forward.1} parent=11 // pred_check
        %p251 = pneg %p103
      $region14: #{convnext_forward.1} parent=11 // pred_check_branch
        %253 = sbr.rel (%p251) target = $region16
      $region15: #{convnext_forward.1} parent=11 // pred_region
        _
      $region16: #{convnext_forward.1} parent=11 // pred_fallthru
        _
      // Predicated region
      $region17: #{convnext_forward.1} parent=11 // pred_check
        %p254 = pneg %p124
      $region18: #{convnext_forward.1} parent=11 // pred_check_branch
        %256 = sbr.rel (%p254) target = $region20
      $region19: #{convnext_forward.1} parent=11 // pred_region
        _
      $region20: #{convnext_forward.1} parent=11 // pred_fallthru
        _
      // Predicated region
      $region21: #{convnext_forward.1} parent=11 // pred_check
        %p257 = pneg %p145
      $region22: #{convnext_forward.1} parent=11 // pred_check_branch
        %259 = sbr.rel (%p257) target = $region24
      $region23: #{convnext_forward.1} parent=11 // pred_region
        _
      $region24: #{convnext_forward.1} parent=11 // pred_fallthru
        _
      // Predicated region
      $region25: #{convnext_forward.1} parent=11 // pred_check
        %p260 = pneg %p166
      $region26: #{convnext_forward.1} parent=11 // pred_check_branch
        %262 = sbr.rel (%p260) target = $region28
      $region27: #{convnext_forward.1} parent=11 // pred_region
        _
      $region28: #{convnext_forward.1} parent=11 // pred_fallthru
        _
      // Predicated region
      $region29: #{convnext_forward.1} parent=11 // pred_check
        %p263 = pneg %p187
      $region30: #{convnext_forward.1} parent=11 // pred_check_branch
        %265 = sbr.rel (%p263) target = $region32
      $region31: #{convnext_forward.1} parent=11 // pred_region
        _
      $region32: #{convnext_forward.1} parent=11 // pred_fallthru
        _
      // Predicated region
      $region33: #{convnext_forward.1} parent=11 // pred_check
        %p266 = pneg %p208
      $region34: #{convnext_forward.1} parent=11 // pred_check_branch
        %268 = sbr.rel (%p266) target = $region36
      $region35: #{convnext_forward.1} parent=11 // pred_region
        _
      $region36: #{convnext_forward.1} parent=11 // pred_fallthru
        _
    $region12: #{convnext_forward.1} parent=5 // pred_fallthru
      _
    %p269 = scmp.lt.s32.totalorder %s14, 2
    // Predicated region
    $region37: #{convnext_forward.1} parent=5 // pred_check
      %p270 = pneg %p269
    $region38: #{convnext_forward.1} parent=5 // pred_check_branch
      %272 = sbr.rel (%p270) target = $region40
    $region39: #{convnext_forward.1} parent=5 // pred_region
      // Predicated region
      $region41: #{convnext_forward.1} parent=39 // pred_check
        %p273 = pneg %p48
      $region42: #{convnext_forward.1} parent=39 // pred_check_branch
        %275 = sbr.rel (%p273) target = $region44
      $region43: #{convnext_forward.1} parent=39 // pred_region
        %s276 = smul.u32 2, %s22
        %p277 = scmp.lt.s32.totalorder %s21, 1
        %s278 = scalar_select %p277, %s21, 1
        %p279 = scmp.lt.s32.totalorder %s276, 1
        %s280 = scalar_select %p279, %s276, 1
        %s281 = smul.addr %s278, 2
        %s282 = sadd.s32 %s280, %s281
        %s283 = smul.addr %s282, 4
        %s284 = scalar_lea.vmem %s0, %s283
        %s285 = smul.u32 2, %s22
      $region44: #{convnext_forward.1} parent=39 // pred_fallthru
        _
      // Predicated region
      $region45: #{convnext_forward.1} parent=39 // pred_check
        %p286 = pneg %p76
      $region46: #{convnext_forward.1} parent=39 // pred_check_branch
        %288 = sbr.rel (%p286) target = $region48
      $region47: #{convnext_forward.1} parent=39 // pred_region
        %s289 = smul.u32 2, %s22
        %p290 = scmp.lt.s32.totalorder %s21, 1
        %s291 = scalar_select %p290, %s21, 1
        %p292 = scmp.lt.s32.totalorder %s289, 1
        %s293 = scalar_select %p292, %s289, 1
        %s294 = smul.addr %s291, 2
        %s295 = sadd.s32 %s293, %s294
        %s296 = smul.addr %s295, 4
        %s297 = scalar_lea.vmem %s1, %s296
        %s298 = smul.u32 2, %s22
      $region48: #{convnext_forward.1} parent=39 // pred_fallthru
        _
    $region40: #{convnext_forward.1} parent=5 // pred_fallthru
      _
    %p299 = scmp.le.s32.totalorder 1, %s14
    %p300 = scmp.lt.s32.totalorder %s14, 3
    %p301 = pnand %p299, %p300
    %p302 = pneg %p301
    // Predicated region
    $region49: #{convnext_forward.1} parent=5 // pred_check
      _
    $region50: #{convnext_forward.1} parent=5 // pred_check_branch
      %304 = sbr.rel (%p301) target = $region52
    $region51: #{convnext_forward.1} parent=5 // pred_region
      %s305 = ssub.s32 %s14, 1
      %s306 = smul.u32 2, %s24
      %p307 = scmp.lt.s32.totalorder %s23, 1
      %s308 = scalar_select %p307, %s23, 1
      %p309 = scmp.lt.s32.totalorder %s306, 1
      %s310 = scalar_select %p309, %s306, 1
      %s311 = smul.addr %s308, 2
      %s312 = sadd.s32 %s310, %s311
      %s313 = smul.addr %s312, 4
      %s314 = scalar_lea.vmem %s0, %s313
      %p315 = pneg %p54
      %p316 = pneg %p51
      %s317 = smul.u32 2, %s24
      %p318 = scmp.lt.s32.totalorder %s23, 1
      %s319 = scalar_select %p318, %s23, 1
      %p320 = scmp.lt.s32.totalorder %s317, 1
      %s321 = scalar_select %p320, %s317, 1
      %s322 = smul.addr %s319, 2
      %s323 = sadd.s32 %s321, %s322
      %s324 = smul.addr %s323, 4
      %s325 = scalar_lea.vmem %s1, %s324
      %p326 = pneg %p82
      %p327 = pneg %p79
      %p328 = pneg %p103
      %p329 = pneg %p100
      %p330 = pneg %p124
      %p331 = pneg %p121
      %p332 = pneg %p145
      %p333 = pneg %p142
      %p334 = pneg %p166
      %p335 = pneg %p163
      %p336 = pneg %p187
      %p337 = pneg %p184
      %p338 = pneg %p208
      %p339 = pneg %p205
      %p340 = pneg %p236
      %p341 = pneg %p233
      %s342 = smul.u32 2, %s24
      %p343 = scmp.lt.s32.totalorder %s23, 1
      %s344 = scalar_select %p343, %s23, 1
      %p345 = scmp.lt.s32.totalorder %s342, 1
      %s346 = scalar_select %p345, %s342, 1
      %s347 = smul.addr %s344, 2
      %s348 = sadd.s32 %s346, %s347
      %s349 = smul.addr %s348, 4
      %s350 = scalar_lea.vmem %s8, %s349
      %s351 = smul.u32 2, %s24
      %p352 = scmp.lt.s32.totalorder %s23, 1
      %s353 = scalar_select %p352, %s23, 1
      %p354 = scmp.lt.s32.totalorder %s351, 1
      %s355 = scalar_select %p354, %s351, 1
      %s356 = smul.addr %s353, 2
      %s357 = sadd.s32 %s355, %s356
      %s358 = smul.addr %s357, 4
      %s359 = scalar_lea.vmem %s0, %s358
      %s360 = smul.u32 2, %s24
      %s361 = smul.u32 2, %s24
      %p362 = scmp.lt.s32.totalorder %s23, 1
      %s363 = scalar_select %p362, %s23, 1
      %p364 = scmp.lt.s32.totalorder %s361, 1
      %s365 = scalar_select %p364, %s361, 1
      %s366 = smul.addr %s363, 2
      %s367 = sadd.s32 %s365, %s366
      %s368 = smul.addr %s367, 4
      %s369 = scalar_lea.vmem %s1, %s368
      %s370 = smul.u32 2, %s24
      %s371 = smul.u32 2, %s24
      %p372 = scmp.lt.s32.totalorder %s23, 1
      %s373 = scalar_select %p372, %s23, 1
      %p374 = scmp.lt.s32.totalorder %s371, 1
      %s375 = scalar_select %p374, %s371, 1
      %s376 = smul.addr %s373, 2
      %s377 = sadd.s32 %s375, %s376
      %s378 = smul.addr %s377, 4
      %s379 = scalar_lea.vmem %s8, %s378
      %s380 = smul.u32 2, %s24
      %v381 = vld [vmem:[%s359] sm:$0xff]
      %v383 = vcombine.high %v381, %v381
      %vm385 = vcmask 1043456
      %v386 = vsel %vm385, %v381, 0.0
      %v387 = vrot.slane %v386, 4
      %v388 = vadd.f32 %v386, %v387
      %v389 = vrot.slane %v388, 2
      %v390 = vadd.f32 %v388, %v389
      %v391 = vrot.slane %v390, 1
      %v392 = vadd.f32 %v390, %v391
      %v393 = vsel %vm385, %v383, 0.0
      %v394 = vrot.slane %v393, 4
      %v395 = vadd.f32 %v393, %v394
      %v396 = vrot.slane %v395, 2
      %v397 = vadd.f32 %v395, %v396
      %v398 = vrot.slane %v397, 1
      %v399 = vadd.f32 %v397, %v398
      %v400 = vmul.f32 %v392, 0.25
      %v401 = vmul.f32 %v399, 0.25
      %v402 = vmul.f32 %v381, %v381
      %v404 = vcombine.high %v402, %v402
      %v406 = vsel %vm385, %v402, 0.0
      %v407 = vrot.slane %v406, 4
      %v408 = vadd.f32 %v406, %v407
      %v409 = vrot.slane %v408, 2
      %v410 = vadd.f32 %v408, %v409
      %v411 = vrot.slane %v410, 1
      %v412 = vadd.f32 %v410, %v411
      %v413 = vsel %vm385, %v404, 0.0
      %v414 = vrot.slane %v413, 4
      %v415 = vadd.f32 %v413, %v414
      %v416 = vrot.slane %v415, 2
      %v417 = vadd.f32 %v415, %v416
      %v418 = vrot.slane %v417, 1
      %v419 = vadd.f32 %v417, %v418
      %v420 = vmul.f32 %v412, 0.25
      %v421 = vmul.f32 %v419, 0.25
      %v422 = vmul.f32 %v400, %v400
      %v423 = vmul.f32 %v401, %v401
      %v424 = vsub.f32 %v420, %v422
      %v425 = vsub.f32 %v421, %v423
      %v426 = vmax.f32 %v424, 0.0
      %v427 = vmax.f32 %v425, 0.0
      %v428 = vadd.f32 %v426, 1e-06
      %v429 = vadd.f32 %v427, 1e-06
      %v430 = vrsqrt.pop %v428
      %v431 = vrsqrt.pop %v429
      %v434 = vcombine.low %v400, %v401
      %v436 = vsub.f32 %v381, %v434
      %v439 = vcombine.low %v430, %v431
      %v441 = vmul.f32 %v436, %v439
      %v442 = vld [vmem:[%s2] sm:$0xf]
      %444 = vset.pattern.permute.xlu0 0
      %445 = vperm.xlu0 %444, %v442
      %v446 = vpop.permute.xlu0 %445
      %v448 = vunpack.c.l.s4 839922192
      %v449 = vunpack.c.0.s8 %v448
      %v450 = vlaneseq
      %v451 = vshrl.u32 %v450, 7
      %v452 = vsub.s32 %v449, %v451
      %v453 = vrot.slane %v446, %v452
      %v455 = vmul.f32 %v441, %v453
      %v456 = vld [vmem:[%s3] sm:$0xf]
      %458 = vset.pattern.permute.xlu0 0
      %459 = vperm.xlu0 %458, %v456
      %v460 = vpop.permute.xlu0 %459
      %v462 = vunpack.c.l.s4 839922192
      %v463 = vunpack.c.0.s8 %v462
      %v464 = vlaneseq
      %v465 = vshrl.u32 %v464, 7
      %v466 = vsub.s32 %v463, %v465
      %v467 = vrot.slane %v460, %v466
      %v469 = vadd.f32 %v455, %v467
      %v470 = vld [vmem:[%s4] sm:$0xff]
      %v471 = vld [vmem:[%s5] sm:$0xff]
      %473 = vset.pattern.permute.xlu0 0
      %474 = vperm.xlu0 %473, %v471
      %v475 = vpop.permute.xlu0 %474
      %v478 = vcombine.high %v469, %v469
      %vm479 = vcmask 31744
      %v481 = vsel %vm479, %v470, 0
      %v483 = vsel %vm385, %v469, 0
      %v485 = vsel %vm385, %v478, 0
      %487 = vmatprep.subr.mxu0 %v485
      %488 = vmatpush1.msra.mxu0 %v483
      %489 = vmatprep.subr.mxu0 0.0
      %490 = vmatpush1.msra.mxu0 0.0
      %491 = vmatprep.subr.mxu0 0.0
      %492 = vmatpush1.msra.mxu0 0.0
      %493 = vmatprep.subr.mxu0 0.0
      %494 = vmatpush1.msra.mxu0 0.0
      %495 = vmatprep.subr.mxu0 0.0
      %496 = vmatpush1.msra.mxu0 0.0
      %497 = vmatprep.subr.mxu0 0.0
      %498 = vmatpush1.msra.mxu0 0.0
      %499 = vmatprep.subr.mxu0 0.0
      %500 = vmatpush1.msra.mxu0 0.0
      %501 = vmatprep.subr.mxu0 0.0
      %502 = vmatpush1.msra.mxu0 0.0
      %503 = vmatprep.subr.mxu0 0.0
      %504 = vmatpush1.msra.mxu0 0.0
      %505 = vmatprep.subr.mxu0 0.0
      %506 = vmatpush1.msra.mxu0 0.0
      %507 = vmatprep.subr.mxu0 0.0
      %508 = vmatpush1.msra.mxu0 0.0
      %509 = vmatprep.subr.mxu0 0.0
      %510 = vmatpush1.msra.mxu0 0.0
      %511 = vmatprep.subr.mxu0 0.0
      %512 = vmatpush1.msra.mxu0 0.0
      %513 = vmatprep.subr.mxu0 0.0
      %514 = vmatpush1.msra.mxu0 0.0
      %515 = vmatprep.subr.mxu0 0.0
      %516 = vmatpush1.msra.mxu0 0.0
      %517 = vmatprep.subr.mxu0 0.0
      %518 = vmatpush1.msra.mxu0 0.0
      %519 = vmatprep.subr.mxu0 0.0
      %520 = vmatpush1.msra.mxu0 0.0
      %521 = vmatprep.subr.mxu0 0.0
      %522 = vmatpush1.msra.mxu0 0.0
      %523 = vmatprep.subr.mxu0 0.0
      %524 = vmatpush1.msra.mxu0 0.0
      %525 = vmatprep.subr.mxu0 0.0
      %526 = vmatpush1.msra.mxu0 0.0
      %527 = vmatprep.subr.mxu0 0.0
      %528 = vmatpush1.msra.mxu0 0.0
      %529 = vmatprep.subr.mxu0 0.0
      %530 = vmatpush1.msra.mxu0 0.0
      %531 = vmatprep.subr.mxu0 0.0
      %532 = vmatpush1.msra.mxu0 0.0
      %533 = vmatprep.subr.mxu0 0.0
      %534 = vmatpush1.msra.mxu0 0.0
      %535 = vmatprep.subr.mxu0 0.0
      %536 = vmatpush1.msra.mxu0 0.0
      %537 = vmatprep.subr.mxu0 0.0
      %538 = vmatpush1.msra.mxu0 0.0
      %539 = vmatprep.subr.mxu0 0.0
      %540 = vmatpush1.msra.mxu0 0.0
      %541 = vmatprep.subr.mxu0 0.0
      %542 = vmatpush1.msra.mxu0 0.0
      %543 = vmatprep.subr.mxu0 0.0
      %544 = vmatpush1.msra.mxu0 0.0
      %545 = vmatprep.subr.mxu0 0.0
      %546 = vmatpush1.msra.mxu0 0.0
      %547 = vmatprep.subr.mxu0 0.0
      %548 = vmatpush1.msra.mxu0 0.0
      %549 = vmatprep.subr.mxu0 0.0
      %550 = vmatpush1.msra.mxu0 0.0
      %551 = vmatprep.mubr.f32.mxu0 0.0
      %552 = vmatmul.mubr.f32.gmra.mrb[0].mxu0 %v481
      %v553 = vpop.f32.mrb[0].mxu0
      %v554 = vadd.f32 %v475, %v553
      %v555 = vpop.f32.mrb[0].mxu0
      %v556 = vadd.f32 %v475, %v555
      %557 = vdwg.mxu0
      %v558 = vmul.f32 %v554, 0.5
      %v559 = vmul.f32 %v556, 0.5
      %v560 = vmul.f32 %v554, 0.70710677
      %v561 = vmul.f32 %v556, 0.70710677
      %v562 = vand.u32 2147483647, %v560
      %v563 = vand.u32 2147483647, %v561
      %v564 = vmul.f32 %v562, 0.3275911
      %v565 = vmul.f32 %v563, 0.3275911
      %v566 = vadd.f32 %v564, 1.0
      %v567 = vadd.f32 %v565, 1.0
      %v568 = vrcp.pop %v566
      %v569 = vmul.f32 1.0, %v568
      %v570 = vrcp.pop %v567
      %v571 = vmul.f32 1.0, %v570
      %v572 = vmul.f32 %v569, 1.0614054
      %v573 = vmul.f32 %v571, 1.0614054
      %v574 = vadd.f32 %v572, -1.4531521
      %v575 = vadd.f32 %v573, -1.4531521
      %v576 = vmul.f32 %v574, %v569
      %v577 = vmul.f32 %v575, %v571
      %v578 = vadd.f32 %v576, 1.4214138
      %v579 = vadd.f32 %v577, 1.4214138
      %v580 = vmul.f32 %v578, %v569
      %v581 = vmul.f32 %v579, %v571
      %v582 = vadd.f32 %v580, -0.28449672
      %v583 = vadd.f32 %v581, -0.28449672
      %v584 = vmul.f32 %v582, %v569
      %v585 = vmul.f32 %v583, %v571
      %v586 = vadd.f32 %v584, 0.2548296
      %v587 = vadd.f32 %v585, 0.2548296
      %v588 = vmul.f32 %v586, %v569
      %v589 = vmul.f32 %v587, %v571
      %v590 = vsub.f32 0.0, %v562
      %v591 = vsub.f32 0.0, %v563
      %v592 = vmul.f32 %v590, %v562
      %v593 = vmul.f32 %v591, %v563
      %v594 = vmul.f32 %v592, 1.442695
      %v595 = vpow.pop %v594
      %v596 = vmul.f32 %v593, 1.442695
      %v597 = vpow.pop %v596
      %v598 = vmul.f32 %v588, %v595
      %v599 = vmul.f32 %v589, %v597
      %v600 = vsub.f32 1.0, %v598
      %v601 = vsub.f32 1.0, %v599
      %vm602 = vcmp.lt.f32.partialorder %v560, 0.0
      %vm603 = vcmp.lt.f32.partialorder %v561, 0.0
      %v604 = vsub.f32 0.0, %v600
      %v605 = vsub.f32 0.0, %v601
      %v606 = vsel %vm602, %v604, %v600
      %v607 = vsel %vm603, %v605, %v601
      %v608 = vadd.f32 %v606, 1.0
      %v609 = vadd.f32 %v607, 1.0
      %v610 = vmul.f32 %v558, %v608
      %v611 = vmul.f32 %v559, %v609
      %v612 = vld [vmem:[%s6] sm:$0xf]
      %v613 = vld [vmem:[%s7] sm:$0xf]
      %615 = vset.pattern.permute.xlu0 0
      %616 = vperm.xlu0 %615, %v613
      %v617 = vpop.permute.xlu0 %616
      %vm619 = vcmask 64512
      %v621 = vsel %vm619, %v612, 0
      %623 = vmatprep.subr.mxu0 %v611
      %624 = vmatpush1.msra.mxu0 %v610
      %625 = vmatprep.subr.mxu0 0.0
      %626 = vmatpush1.msra.mxu0 0.0
      %627 = vmatprep.subr.mxu0 0.0
      %628 = vmatpush1.msra.mxu0 0.0
      %629 = vmatprep.subr.mxu0 0.0
      %630 = vmatpush1.msra.mxu0 0.0
      %631 = vmatprep.subr.mxu0 0.0
      %632 = vmatpush1.msra.mxu0 0.0
      %633 = vmatprep.subr.mxu0 0.0
      %634 = vmatpush1.msra.mxu0 0.0
      %635 = vmatprep.subr.mxu0 0.0
      %636 = vmatpush1.msra.mxu0 0.0
      %637 = vmatprep.subr.mxu0 0.0
      %638 = vmatpush1.msra.mxu0 0.0
      %639 = vmatprep.subr.mxu0 0.0
      %640 = vmatpush1.msra.mxu0 0.0
      %641 = vmatprep.subr.mxu0 0.0
      %642 = vmatpush1.msra.mxu0 0.0
      %643 = vmatprep.subr.mxu0 0.0
      %644 = vmatpush1.msra.mxu0 0.0
      %645 = vmatprep.subr.mxu0 0.0
      %646 = vmatpush1.msra.mxu0 0.0
      %647 = vmatprep.subr.mxu0 0.0
      %648 = vmatpush1.msra.mxu0 0.0
      %649 = vmatprep.subr.mxu0 0.0
      %650 = vmatpush1.msra.mxu0 0.0
      %651 = vmatprep.subr.mxu0 0.0
      %652 = vmatpush1.msra.mxu0 0.0
      %653 = vmatprep.subr.mxu0 0.0
      %654 = vmatpush1.msra.mxu0 0.0
      %655 = vmatprep.subr.mxu0 0.0
      %656 = vmatpush1.msra.mxu0 0.0
      %657 = vmatprep.subr.mxu0 0.0
      %658 = vmatpush1.msra.mxu0 0.0
      %659 = vmatprep.subr.mxu0 0.0
      %660 = vmatpush1.msra.mxu0 0.0
      %661 = vmatprep.subr.mxu0 0.0
      %662 = vmatpush1.msra.mxu0 0.0
      %663 = vmatprep.subr.mxu0 0.0
      %664 = vmatpush1.msra.mxu0 0.0
      %665 = vmatprep.subr.mxu0 0.0
      %666 = vmatpush1.msra.mxu0 0.0
      %667 = vmatprep.subr.mxu0 0.0
      %668 = vmatpush1.msra.mxu0 0.0
      %669 = vmatprep.subr.mxu0 0.0
      %670 = vmatpush1.msra.mxu0 0.0
      %671 = vmatprep.subr.mxu0 0.0
      %672 = vmatpush1.msra.mxu0 0.0
      %673 = vmatprep.subr.mxu0 0.0
      %674 = vmatpush1.msra.mxu0 0.0
      %675 = vmatprep.subr.mxu0 0.0
      %676 = vmatpush1.msra.mxu0 0.0
      %677 = vmatprep.subr.mxu0 0.0
      %678 = vmatpush1.msra.mxu0 0.0
      %679 = vmatprep.subr.mxu0 0.0
      %680 = vmatpush1.msra.mxu0 0.0
      %681 = vmatprep.subr.mxu0 0.0
      %682 = vmatpush1.msra.mxu0 0.0
      %683 = vmatprep.subr.mxu0 0.0
      %684 = vmatpush1.msra.mxu0 0.0
      %685 = vmatprep.subr.mxu0 0.0
      %686 = vmatpush1.msra.mxu0 0.0
      %687 = vmatprep.mubr.f32.mxu0 0.0
      %688 = vmatmul.mubr.f32.gmra.mrb[0].mxu0 %v621
      %v689 = vpop.f32.mrb[0].mxu0
      %v690 = vadd.f32 %v617, %v689
      %v691 = vpop.f32.mrb[0].mxu0
      %v692 = vadd.f32 %v617, %v691
      %693 = vdwg.mxu0
      %v694 = vld [vmem:[%s369] sm:$0xff]
      %v696 = vcombine.high %v694, %v694
      %v698 = vadd.f32 %v690, %v694
      %v699 = vadd.f32 %v692, %v696
      %v702 = vcombine.low %v698, %v699
      %704 = vst [vmem:[%s379] sm:$0xff] %v702
      %s705 = smul.u32 2, %s24
      %p706 = scmp.lt.s32.totalorder %s23, 1
      %s707 = scalar_select %p706, %s23, 1
      %p708 = scmp.lt.s32.totalorder %s705, 1
      %s709 = scalar_select %p708, %s705, 1
      %s710 = smul.addr %s707, 2
      %s711 = sadd.s32 %s709, %s710
      %s712 = smul.addr %s711, 4
      %s713 = scalar_lea.vmem %s8, %s712
      // Predicated region
      $region53: #{convnext_forward.1} parent=51 // pred_check
        %p714 = pneg %p233
      $region54: #{convnext_forward.1} parent=51 // pred_check_branch
        %716 = sbr.rel (%p714) target = $region56
      $region55: #{convnext_forward.1} parent=51 // pred_region
        %s717 = smul.u32 2, %s24
      $region56: #{convnext_forward.1} parent=51 // pred_fallthru
        _
    $region52: #{convnext_forward.1} parent=5 // pred_fallthru
      _
    %p718 = scmp.le.s32.totalorder 2, %s14
    // Predicated region
    $region57: #{convnext_forward.1} parent=5 // pred_check
      %p719 = pneg %p718
    $region58: #{convnext_forward.1} parent=5 // pred_check_branch
      %721 = sbr.rel (%p719) target = $region60
    $region59: #{convnext_forward.1} parent=5 // pred_region
      %s722 = ssub.s32 %s14, 2
      // Predicated region
      $region61: #{convnext_forward.1} parent=59 // pred_check
        %p723 = pneg %p239
      $region62: #{convnext_forward.1} parent=59 // pred_check_branch
        %725 = sbr.rel (%p723) target = $region64
      $region63: #{convnext_forward.1} parent=59 // pred_region
        %s726 = smul.u32 2, %s26
        %p727 = scmp.lt.s32.totalorder %s25, 1
        %s728 = scalar_select %p727, %s25, 1
        %p729 = scmp.lt.s32.totalorder %s726, 1
        %s730 = scalar_select %p729, %s726, 1
        %s731 = smul.addr %s728, 2
        %s732 = sadd.s32 %s730, %s731
        %s733 = smul.addr %s732, 4
        %s734 = scalar_lea.vmem %s8, %s733
      $region64: #{convnext_forward.1} parent=59 // pred_fallthru
        _
    $region60: #{convnext_forward.1} parent=5 // pred_fallthru
      _
  $region6: #{convnext_forward.1} parent=0 // loop_footer
    %s18 = sadd.s32 1, %s14
  $region7: #{convnext_forward.1} parent=0 // loop_footer_branch
    %13 = sbr.rel target = $region3
  $region8: #{convnext_forward.1} parent=0 // loop_exit
    _

</llo_original>
